<compile_context>
chip_gen: v5e
topology: v5e:2x2
jax: 0.10.0
libtpu: 0.0.40
codegen_flags: <defaults>
</compile_context>

<pallas_src>
import math

import jax
import jax.numpy as jnp
from jax.experimental import pallas as pl
from jax.experimental.pallas import tpu as pltpu


_MIN_CHUNK_BYTES = 4 * 1024 * 1024   # don't split DMAs below ~4 MiB each
_MAX_CHUNKS = 8                      # a handful of concurrent DMA streams


def _choose_num_chunks(shape, itemsize):
    """How many concurrent DMA streams to use for the HBM->HBM copy."""
    if len(shape) == 0:
        return 1
    lead = shape[0]
    nbytes = math.prod(shape) * itemsize
    if lead < 2 or nbytes < 2 * _MIN_CHUNK_BYTES:
        return 1
    return int(min(_MAX_CHUNKS, lead, nbytes // _MIN_CHUNK_BYTES))


def _make_dma_copy_kernel(lead, n_chunks):
    """Build a kernel that DMAs the whole HBM buffer (in 1..n chunks)."""
    if n_chunks <= 1:
        def kernel(x_ref, o_ref, sem):
            cp = pltpu.make_async_copy(x_ref, o_ref, sem.at[0])
            cp.start()
            cp.wait()
        return kernel

    # Static, equal-ish chunk boundaries along the leading dim.
    bounds = [(c * lead) // n_chunks for c in range(n_chunks + 1)]

    def kernel(x_ref, o_ref, sem):
        copies = []
        for c in range(n_chunks):               # static Python unroll
            lo = bounds[c]
            sz = bounds[c + 1] - bounds[c]
            cp = pltpu.make_async_copy(
                x_ref.at[pl.ds(lo, sz)],
                o_ref.at[pl.ds(lo, sz)],
                sem.at[c])
            cp.start()                           # all chunks in flight
            copies.append(cp)
        for cp in copies:
            cp.wait()

    return kernel


def _pallas_materialized_copy(x):
    """Identity copy of `x` through a direct HBM->HBM DMA Pallas kernel."""
    n_chunks = _choose_num_chunks(x.shape, x.dtype.itemsize)
    lead = x.shape[0] if x.ndim >= 1 else 1
    kernel = _make_dma_copy_kernel(lead, n_chunks)
    nbytes = x.size * x.dtype.itemsize
    return pl.pallas_call(
        kernel,
        out_shape=jax.ShapeDtypeStruct(x.shape, x.dtype),
        in_specs=[pl.BlockSpec(memory_space=pl.ANY)],    # raw HBM ref
        out_specs=pl.BlockSpec(memory_space=pl.ANY),     # raw HBM ref
        scratch_shapes=[pltpu.SemaphoreType.DMA((max(n_chunks, 1),))],
        cost_estimate=pl.CostEstimate(
            flops=0,
            transcendentals=0,
            bytes_accessed=2 * nbytes,
        ),
    )(x)


class Reshape:
    """JAX/Pallas equivalent of the PyTorch Reshape(nn.Module).

    Default: metadata-only reshape (zero HBM traffic), exactly like
    torch.view on a contiguous tensor.  `materialize=True` forces the data
    through the Pallas HBM->HBM DMA copy kernel before reshaping.
    """

    def __init__(self, *args, materialize=False):
        self.shape = args
        self.materialize = materialize

    def _resolve_shape(self, total):
        shape = list(self.shape)
        if shape.count(-1) > 1:
            raise ValueError("view(): only one dimension can be inferred")
        if -1 in shape:
            idx = shape.index(-1)
            known = math.prod(d for d in shape if d != -1)
            if known == 0 or total % known != 0:
                raise ValueError(
                    f"view(): shape {tuple(self.shape)} is invalid for input "
                    f"of size {total}")
            shape[idx] = total // known
        if math.prod(shape) != total:
            raise ValueError(
                f"view(): shape {tuple(self.shape)} is invalid for input of "
                f"size {total}")
        return tuple(shape)

    def __call__(self, x):
        total = math.prod(x.shape)
        target = self._resolve_shape(total)
        if self.materialize:
            # Fresh buffer: one HBM->HBM DMA in the input's original shape,
            # then the same metadata-only reshape as the default path.
            x = _pallas_materialized_copy(x)
        return x.reshape(target)


if __name__ == "__main__":
    key = jax.random.PRNGKey(0)
    # Small NCHW-ish input, e.g. a conv feature map being flattened for a
    # linear layer in the BayesGAN generator.
    x = jax.random.normal(key, (2, 4, 16, 16), dtype=jnp.float32)
    ref = x.reshape(-1, 4 * 16 * 16)

    # Fast (default) path: metadata-only reshape.
    y_meta = Reshape(-1, 4 * 16 * 16)(x)
    jax.block_until_ready(y_meta)
    assert y_meta.shape == ref.shape and y_meta.dtype == ref.dtype
    assert bool(jnp.array_equal(y_meta, ref))

    # Materialized path: exercises the Pallas HBM->HBM DMA copy kernel.
    y_copy = Reshape(-1, 4 * 16 * 16, materialize=True)(x)
    jax.block_until_ready(y_copy)
    assert y_copy.shape == ref.shape and y_copy.dtype == ref.dtype
    assert bool(jnp.array_equal(y_copy, ref))

    # Non-128-aligned element count: no padding / post-slice copies needed.
    x2 = jax.random.normal(jax.random.PRNGKey(0), (6, 100), dtype=jnp.float32)
    y2 = Reshape(3, -1, materialize=True)(x2)
    jax.block_until_ready(y2)
    assert y2.shape == (3, 200) and bool(jnp.array_equal(y2, x2.reshape(3, 200)))

    print("KERNEL_OK")
</pallas_src>

<mosaic_0001>
module attributes {stable_mosaic.version = 11 : i64} {
  func.func @kernel(%arg0: memref<2x4x16x16xf32, #tpu.memory_space<any>>, %arg1: memref<2x4x16x16xf32, #tpu.memory_space<any>>, %arg2: memref<1x!tpu.dma_semaphore, #tpu.memory_space<semaphore_mem>>) attributes {dimension_semantics = [], scalar_prefetch = 0 : i64, scratch_operands = 1 : i64, tpu.core_type = #tpu.core_type<tc>} {
    %c0_i32 = arith.constant 0 : i32
    %0 = tpu.memref_slice %arg2[%c0_i32] : memref<1x!tpu.dma_semaphore, #tpu.memory_space<semaphore_mem>> -> memref<1x!tpu.dma_semaphore, #tpu.memory_space<semaphore_mem>>
    %1 = tpu.memref_squeeze %0 : memref<1x!tpu.dma_semaphore, #tpu.memory_space<semaphore_mem>> -> memref<!tpu.dma_semaphore, #tpu.memory_space<semaphore_mem>>
    tpu.enqueue_dma source(%arg0 : memref<2x4x16x16xf32, #tpu.memory_space<any>>) target(%arg1 : memref<2x4x16x16xf32, #tpu.memory_space<any>>) target_semaphore(%1 : memref<!tpu.dma_semaphore, #tpu.memory_space<semaphore_mem>>)
    %c0_i32_0 = arith.constant 0 : i32
    %2 = tpu.memref_slice %arg2[%c0_i32_0] : memref<1x!tpu.dma_semaphore, #tpu.memory_space<semaphore_mem>> -> memref<1x!tpu.dma_semaphore, #tpu.memory_space<semaphore_mem>>
    %3 = tpu.memref_squeeze %2 : memref<1x!tpu.dma_semaphore, #tpu.memory_space<semaphore_mem>> -> memref<!tpu.dma_semaphore, #tpu.memory_space<semaphore_mem>>
    tpu.wait_dma2 semaphore(%3 : memref<!tpu.dma_semaphore, #tpu.memory_space<semaphore_mem>>) src(%arg0 : memref<2x4x16x16xf32, #tpu.memory_space<any>>) dst(%arg1 : memref<2x4x16x16xf32, #tpu.memory_space<any>>)
    return
  }
}

</mosaic_0001>

<llo_original>
// kernel: tpu_custom_call.1
$region0: #{tpu_custom_call.1}
  #allocation0 [shape = 'u32[]', space=smem, size = 0x4, offset = 0x4, fixed_abs, tag = 'smem constant byte address 0x4 - core index']
  #allocation1 [shape = 'u32[72,128]{1,0:T(1,128)}', space=vmem, size = 0x9000, scoped, tag = 'internal scratch']
  #allocation2 [shape = 's32[1]{0}', space=sflag, size = 0x4, scoped, tag = 'scratch operand']
  #allocation3 [shape = 's32[]', space=sflag, size = 0x4, offset = 0, fixed_abs, tag = 'sflag constant byte address 0x0 - dummy sync flag']
  #allocation4 [shape = 'u32[0]{0}', space=smem, size = 0, offset = 0, fixed_abs, tag = 'smem constant byte address 0x0 - null']
  %s0 = inlined_call_operand.hbm [shape: f32[2,4,16,16], index: 0, kind: input, shape index: {}]
  %s1 = inlined_call_operand.hbm [shape: f32[2,4,16,16], index: 1, kind: output, shape index: {}]
  %s2 = sld [smem:[#allocation0]]
  $region2: #{tpu_custom_call.1} parent=0
    _
  %s4 = ssub.s32 1, %s2
  %s5 = scalar_select 0, %s4, %s2
  %s7 = sshll.u32 1, 14
  %s8 = sxor.u32 4294967295, %s7
  %s10 = sshll.u32 %s0, 4
  %s11 = int_to_ptr.hbm [resolvable:$true] %s10
  %s12 = sshll.u32 %s1, 4
  %s13 = int_to_ptr.hbm [resolvable:$true] %s12
  %16 = dma.general %s11, 2048, %s13, [#allocation2], [#allocation3], [#allocation4], 0, 0
  %s17 = smul.u32 2, 4
  %s18 = smul.u32 %s17, 16
  %s19 = smul.u32 %s18, 1
  %s20 = sshll.u32 %s19, 4
  %21 = dma.done [#allocation2], %s20
  %22 = vsyncmov [#allocation2]
  %s23 = vpop.sfrf %22
  %p24 = scmp.eq.s32.totalorder %s23, 0
  %p25 = pneg %p24
  %27 = shalt.err (%p25)

</llo_original>
